<compile_context>
chip_gen: v6e
topology: v6e:2x2x1
jax: 0.10.0
libtpu: 0.0.40
codegen_flags: <defaults>
</compile_context>

<pallas_src>
import jax
import jax.numpy as jnp
from jax.experimental import pallas as pl
from jax.experimental.pallas import tpu as pltpu


def reduce_sum_ref(x: jax.Array) -> jax.Array:
    """Pure-jnp reference with the literal torch op sequence."""
    axis = x.shape[0] - 1
    x2 = jnp.sum(x, axis=axis)
    x1 = jnp.squeeze(jnp.sum(x, axis=axis, keepdims=True), axis=axis)
    y = x1 + x2
    return jnp.sum(y, axis=-1, keepdims=True)


def _fused_jnp(x: jax.Array, reduce_axis: int) -> jax.Array:
    # x1 + x2 == 2 * sum(reduce_axis); then the trailing sum(-1, keepdim).
    return jnp.sum(jnp.sum(x, axis=reduce_axis) * 2, axis=-1, keepdims=True)


def _vmem_limit_bytes() -> int:
    """~75% of physical VMEM: 48 MiB on v7x, 96 MiB on v5e/v6e."""
    try:
        cap = pltpu.get_tpu_info().vmem_capacity_bytes
    except Exception:
        cap = 64 * 1024 * 1024  # most conservative physical size across v5e/v6e/v7x
    return min(int(cap * 3 // 4), 100 * 1024 * 1024)


_TINY_BYTES = 1 << 20  # below this, XLA's fused reduction beats kernel dispatch


def reduce_sum(x: jax.Array, *, force_pallas: bool = False,
               max_block_bytes: int | None = None) -> jax.Array:
    ndim = x.ndim
    if ndim < 2:
        raise ValueError("RecudeSum needs at least a 2-D input")

    reduce_axis = x.shape[0] - 1  # static at trace time (torch: x.shape[0]-1)
    if not (0 <= reduce_axis < ndim):
        raise ValueError("x.shape[0] - 1 must be a valid axis of x")

    # The trailing .sum(-1, keepdim=True) axis, in ORIGINAL coordinates.
    final_axis = ndim - 1 if reduce_axis != ndim - 1 else ndim - 2
    # Exactly one of {reduce_axis, final_axis} is the lane axis (ndim-1); reduce
    # the non-lane one first (VPU adds), lane axis last (one XLU reduce).
    inner_axis = reduce_axis if reduce_axis != ndim - 1 else final_axis

    kept_axes = tuple(i for i in range(ndim) if i not in (reduce_axis, final_axis))
    kept_shape = tuple(x.shape[i] for i in kept_axes)
    out_shape_final = kept_shape + (1,)

    if len(kept_axes) == 0:
        # TODO(synk): degenerate 2-D case (both axes reduced); plain jnp fallback.
        return reduce_sum_ref(x)

    x_bytes = x.size * x.dtype.itemsize

    # --- tiny-input fast path ------------------------------------------------
    if not force_pallas and x_bytes < _TINY_BYTES:
        return _fused_jnp(x, reduce_axis)

    # Accumulate narrow dtypes in 32-bit; cast back at the final store.
    if jnp.issubdtype(x.dtype, jnp.floating):
        acc_dtype = jnp.float32
    elif jnp.issubdtype(x.dtype, jnp.integer):
        # TODO(synk): torch promotes integer sums to int64; we accumulate in int32.
        acc_dtype = jnp.int32
    else:
        acc_dtype = x.dtype
    out_dtype = x.dtype

    # --- generation-aware VMEM policy ----------------------------------------
    vmem_limit = _vmem_limit_bytes()
    headroom = 2 * 1024 * 1024           # output double-buffers + internal scratch
    budget = max(1 << 20, (vmem_limit - headroom) // 2)  # per double-buffered input
    if max_block_bytes is not None:       # test / debug override
        budget = min(budget, max_block_bytes)

    out_elems = 1
    for d in out_shape_final:
        out_elems *= d
    cost = pl.CostEstimate(
        flops=int(x.size),
        transcendentals=0,
        bytes_accessed=int(x_bytes + out_elems * jnp.dtype(out_dtype).itemsize))

    # --- single kept axis (3-D input): whole-array block if it fits ----------
    if len(kept_axes) == 1:
        K = kept_shape[0]
        if x_bytes <= vmem_limit - headroom:
            def kernel1(x_ref, o_ref):
                partial = jnp.sum(x_ref[...], axis=inner_axis, dtype=acc_dtype)
                y = jnp.sum(partial, axis=-1, keepdims=True) * 2
                o_ref[...] = y.astype(out_dtype)

            out2d = pl.pallas_call(
                kernel1,
                out_shape=jax.ShapeDtypeStruct((K, 1), out_dtype),
                compiler_params=pltpu.CompilerParams(vmem_limit_bytes=vmem_limit),
                cost_estimate=cost,
            )(x)
            return out2d.reshape(out_shape_final)
        # TODO(synk): tile the single-kept-axis case when it exceeds VMEM.
        return _fused_jnp(x, reduce_axis)

    # --- general case: >=2 kept axes ------------------------------------------
    lead_pos = kept_axes[0]               # never one of the last two axes here
    lead = x.shape[lead_pos]
    rest_shape = kept_shape[1:]
    R = 1
    for d in rest_shape:
        R *= d
    row_bytes = (x.size // lead) * x.dtype.itemsize
    rows_fit = budget // row_bytes

    # Output slab: (lead, 1, R). The tiled dim is the leading (not last-two) dim,
    # so tb is unconstrained; last dim is lane-dense (all non-leading kept dims).
    out_pallas_shape = (lead, 1, R)

    if rows_fit >= 1:
        # ---- tile only the leading kept axis (fully independent rows) -------
        if rows_fit >= lead:
            tb = max(1, (lead + 1) // 2)   # >= 2 grid steps -> both v7x TCs get work
        else:
            tb = int(rows_fit)
        n_lead = (lead + tb - 1) // tb
        block_bytes = tb * row_bytes

        in_block = list(x.shape)
        in_block[lead_pos] = tb

        def in_index_map(i):
            idx = [0] * ndim
            idx[lead_pos] = i
            return tuple(idx)

        # Deeper pipelining only when tiles are moderate and VMEM has headroom.
        n_buf = 3 if (n_lead >= 3 and block_bytes >= (2 << 20)
                      and 3 * block_bytes + headroom <= vmem_limit) else 2
        if n_buf == 3:
            in_spec = pl.BlockSpec(tuple(in_block), in_index_map,
                                   pipeline_mode=pl.Buffered(3))
        else:
            in_spec = pl.BlockSpec(tuple(in_block), in_index_map)

        def kernel(x_ref, o_ref):
            # Fused: x1 + x2 == 2 * sum(reduce_axis); then the trailing sum(-1).
            partial = jnp.sum(x_ref[...], axis=inner_axis, dtype=acc_dtype)  # VPU
            y = jnp.sum(partial, axis=-1) * 2                                # XLU
            y2 = y.reshape(y.shape[0], -1)                                   # (tb, R)
            o_ref[:, 0, :] = y2.astype(out_dtype)

        out3d = pl.pallas_call(
            kernel,
            out_shape=jax.ShapeDtypeStruct(out_pallas_shape, out_dtype),
            grid=(n_lead,),
            in_specs=[in_spec],
            out_specs=pl.BlockSpec((tb, 1, R), lambda i: (i, 0, 0)),
            compiler_params=pltpu.CompilerParams(
                dimension_semantics=("parallel",),
                vmem_limit_bytes=vmem_limit),
            cost_estimate=cost,
        )(x)
        return out3d.reshape(out_shape_final)

    # ---- huge-row guard: split the non-lane reduced axis into an "arbitrary"
    #      grid dim with a VMEM accumulator (P3 pattern) -----------------------
    inner_size = x.shape[inner_axis]
    slice_bytes = row_bytes // inner_size      # one lead row, one inner element
    ti_max = int(budget // max(slice_bytes, 1))
    need_align8 = (inner_axis == ndim - 2)     # (8,128) rule on second-to-last dim
    ti = 0
    for cand in range(min(inner_size, max(ti_max, 0)), 0, -1):
        if inner_size % cand != 0:             # exact tiling: no padded garbage summed
            continue
        if need_align8 and not (cand % 8 == 0 or cand == inner_size):
            continue
        ti = cand
        break
    if ti == 0:
        # TODO(synk): even a single inner slice exceeds VMEM; plain jnp fallback.
        return _fused_jnp(x, reduce_axis)

    tb = min(lead, max(1, int(budget // (ti * slice_bytes))))
    n_lead = (lead + tb - 1) // tb
    n_inner = inner_size // ti

    in_block = list(x.shape)
    in_block[lead_pos] = tb
    in_block[inner_axis] = ti

    def in_index_map_acc(i, k):
        idx = [0] * ndim
        idx[lead_pos] = i
        idx[inner_axis] = k
        return tuple(idx)

    def kernel_acc(x_ref, o_ref, acc_ref):
        k = pl.program_id(1)

        @pl.when(k == 0)
        def _init():
            acc_ref[...] = jnp.zeros_like(acc_ref)

        partial = jnp.sum(x_ref[...], axis=inner_axis, dtype=acc_dtype)
        y = jnp.sum(partial, axis=-1)
        acc_ref[...] += y.reshape(acc_ref.shape)

        @pl.when(k == pl.num_programs(1) - 1)
        def _store():
            o_ref[:, 0, :] = (acc_ref[...] * 2).astype(out_dtype)

    out3d = pl.pallas_call(
        kernel_acc,
        out_shape=jax.ShapeDtypeStruct(out_pallas_shape, out_dtype),
        grid=(n_lead, n_inner),
        in_specs=[pl.BlockSpec(tuple(in_block), in_index_map_acc)],
        out_specs=pl.BlockSpec((tb, 1, R), lambda i, k: (i, 0, 0)),
        scratch_shapes=[pltpu.VMEM((tb, R), acc_dtype)],
        compiler_params=pltpu.CompilerParams(
            dimension_semantics=("parallel", "arbitrary"),
            vmem_limit_bytes=vmem_limit),
        cost_estimate=cost,
    )(x)
    return out3d.reshape(out_shape_final)


if __name__ == "__main__":
    k0, k1 = jax.random.split(jax.random.PRNGKey(0))

    # batch=2, channels=4, spatial=16x16 -> torch reduce axis = 2 - 1 = 1 (channels)
    x = jax.random.normal(k0, (2, 4, 16, 16), dtype=jnp.float32)
    ref = reduce_sum_ref(x)
    assert ref.shape == (2, 16, 1) and ref.dtype == jnp.float32

    # 1) Default dispatch: tiny-input fast path (fused jnp).
    out_fast = jax.block_until_ready(reduce_sum(x))
    assert out_fast.shape == ref.shape and out_fast.dtype == ref.dtype
    assert jnp.allclose(out_fast, ref, atol=1e-3, rtol=1e-5)

    # 2) Pallas tiled path: grid over the leading kept axis (2 parallel steps).
    out_pl = jax.block_until_ready(reduce_sum(x, force_pallas=True))
    assert out_pl.shape == ref.shape and out_pl.dtype == ref.dtype
    assert jnp.allclose(out_pl, ref, atol=1e-3, rtol=1e-5)

    # 3) Pallas accumulator path: reduced axis split into an "arbitrary" grid dim.
    out_acc = jax.block_until_ready(
        reduce_sum(x, force_pallas=True, max_block_bytes=2048))
    assert out_acc.shape == ref.shape and out_acc.dtype == ref.dtype
    assert jnp.allclose(out_acc, ref, atol=1e-3, rtol=1e-5)

    # 4) Larger input (2 MiB) that dispatches to the Pallas path by default,
    #    with a lane-dense (R=128) output slab.
    xl = jax.random.normal(k1, (2, 8, 128, 256), dtype=jnp.float32)
    refl = reduce_sum_ref(xl)
    outl = jax.block_until_ready(reduce_sum(xl))
    assert outl.shape == refl.shape == (2, 128, 1)
    assert jnp.allclose(outl, refl, atol=1e-2, rtol=1e-5)

    print("KERNEL_OK")
</pallas_src>

<mosaic_0001>
module attributes {stable_mosaic.version = 11 : i64} {
  func.func @kernel(%arg0: i32, %arg1: memref<1x4x16x16xf32, #tpu.memory_space<vmem>>, %arg2: memref<1x1x16xf32, #tpu.memory_space<vmem>>) attributes {dimension_semantics = [#tpu.dimension_semantics<parallel>], iteration_bounds = array<i64: 2>, scalar_prefetch = 0 : i64, scratch_operands = 0 : i64, tpu.core_type = #tpu.core_type<tc>, window_params = [{transform_indices = @transform_0, window_bounds = array<i64: 1, 4, 16, 16>}, {transform_indices = @transform_1, window_bounds = array<i64: 1, 1, 16>}]} {
    %c0 = arith.constant 0 : index
    %c0_0 = arith.constant 0 : index
    %c0_1 = arith.constant 0 : index
    %c0_2 = arith.constant 0 : index
    %0 = vector.load %arg1[%c0, %c0_0, %c0_1, %c0_2] : memref<1x4x16x16xf32, #tpu.memory_space<vmem>>, vector<1x4x16x16xf32>
    %cst = arith.constant dense<0.000000e+00> : vector<1x16x16xf32>
    %1 = vector.multi_reduction <add>, %0, %cst [1] : vector<1x4x16x16xf32> to vector<1x16x16xf32>
    %cst_3 = arith.constant dense<0.000000e+00> : vector<1x16xf32>
    %2 = vector.multi_reduction <add>, %1, %cst_3 [2] : vector<1x16x16xf32> to vector<1x16xf32>
    %cst_4 = arith.constant 2.000000e+00 : f32
    %3 = vector.broadcast %cst_4 : f32 to vector<1x16xf32>
    %4 = arith.mulf %2, %3 : vector<1x16xf32>
    %c0_5 = arith.constant 0 : index
    %c0_6 = arith.constant 0 : index
    %c0_7 = arith.constant 0 : index
    %5 = vector.load %arg2[%c0_5, %c0_6, %c0_7] : memref<1x1x16xf32, #tpu.memory_space<vmem>>, vector<1x1x16xf32>
    %6 = vector.shape_cast %5 : vector<1x1x16xf32> to vector<1x16xf32>
    %7 = vector.shape_cast %4 : vector<1x16xf32> to vector<1x1x16xf32>
    tpu.vector_store %arg2[%c0_5, %c0_6, %c0_7], %7 {strides = array<i32>} : memref<1x1x16xf32, #tpu.memory_space<vmem>>, vector<1x1x16xf32>,
    return
  }
  func.func @transform_0(%arg0: i32) -> (i32, i32, i32, i32) {
    %c0_i32 = arith.constant 0 : i32
    %c0_i32_0 = arith.constant 0 : i32
    %c0_i32_1 = arith.constant 0 : i32
    %c0_i32_2 = arith.constant 0 : i32
    return %arg0, %c0_i32, %c0_i32_0, %c0_i32_1 : i32, i32, i32, i32
  }
  func.func @transform_1(%arg0: i32) -> (i32, i32, i32) {
    %c0_i32 = arith.constant 0 : i32
    %c0_i32_0 = arith.constant 0 : i32
    %c0_i32_1 = arith.constant 0 : i32
    return %arg0, %c0_i32, %c0_i32_0 : i32, i32, i32
  }
}

</mosaic_0001>

<llo_original>
// kernel: tpu_custom_call.1
$region0: #{tpu_custom_call.1}
  #allocation0 [shape = 'u32[]', space=smem, size = 0x4, offset = 0x4, fixed_abs, tag = 'smem constant byte address 0x4 - core index']
  #allocation1 [shape = 'u32[144,128]{1,0:T(1,128)}', space=vmem, size = 0x12000, scoped, tag = 'internal scratch']
  %s0 = inlined_call_operand.hbm [shape: f32[2,4,16,16], index: 0, kind: input, shape index: {}]
  %s1 = inlined_call_operand.hbm [shape: f32[2,1,16], index: 1, kind: output, shape index: {}]
  %s2 = sld [smem:[#allocation0]]
  $region41: #{tpu_custom_call.1} parent=0
    _
  %s4 = ssub.s32 1, %s2
  %s5 = scalar_select 0, %s4, %s2
  $region1: #{tpu_custom_call.1} parent=0
    #allocation2 [shape = 'u8[65536]{0}', space=vmem, size = 0x10000, scoped, tag = 'input window, operand 0']
    #allocation3 [shape = 's32[2]{0}', space=sflag, size = 0x8, scoped, tag = 'scoped memory for tpu_custom_call.1']
    #allocation4 [shape = 's32[2]{0}', space=sflag, size = 0x8, scoped, tag = 'scoped memory for tpu_custom_call.1']
    #allocation5 [shape = 'u8[1024]{0}', space=vmem, size = 0x400, scoped, tag = 'output window, operand 0']
    %6 = vsyncpa [#allocation3], 0
    %s7 = scalar_lea.sflag [#allocation3], 1
    %8 = vsyncpa %s7, 0
    %9 = vsyncpa [#allocation4], 0
    %s10 = scalar_lea.sflag [#allocation4], 1
    %11 = vsyncpa %s10, 0
    loop: start=0, step=1, limit=4
    $region2: #{tpu_custom_call.1} parent=1 // loop_pre_header
      _
    $region3: #{tpu_custom_call.1} parent=1 // loop_header
      %s13 = sphi 0, %s17
      %p14 = scmp.ge.s32.totalorder %s13, 4
      %s23 = sphi 0, %s25
      %s26 = sphi 0, %s23
      %s27 = sphi 0, %s26
      %s43 = sphi 0, %s27
      %s49 = sphi 0, %s51
      %s52 = sphi 0, %s49
      %s53 = sphi 0, %s52
      %s69 = sphi 0, %s53
    $region4: #{tpu_custom_call.1} parent=1 // loop_header_branch
      %16 = sbr.rel (%p14) target = $region8
    $region5: #{tpu_custom_call.1} parent=1 // loop_body
      %s18 = ssub.s32 %s13, 1
      %s19 = ssub.s32 %s13, 2
      %s20 = sadd.s32 %s13, 1
      %s21 = ssub.s32 %s13, %s20
      %p22 = scmp.eq.s32.totalorder %s21, 0
      %s24 = sadd.s32 %s23, 1
      %s25 = scalar_select %p22, %s23, %s24
      %p28 = pneg %p22
      %p29 = scmp.eq.s32.totalorder %s13, 1
      %p30 = por %p28, %p29
      %p31 = scmp.ne.s32.totalorder %s23, %s26
      %p32 = scmp.eq.s32.totalorder %s13, 0
      %p33 = por %p31, %p32
      %p34 = scmp.ne.s32.totalorder %s23, %s26
      %p35 = scmp.eq.s32.totalorder %s18, 1
      %p36 = por %p34, %p35
      %p37 = scmp.ne.s32.totalorder %s26, %s27
      %p38 = scmp.eq.s32.totalorder %s18, 0
      %p39 = por %p37, %p38
      %p40 = scmp.ne.s32.totalorder %s26, %s27
      %p41 = scmp.eq.s32.totalorder %s19, 1
      %p42 = por %p40, %p41
      %p44 = scmp.ne.s32.totalorder %s27, %s43
      %p45 = scmp.eq.s32.totalorder %s19, 0
      %p46 = por %p44, %p45
      %s47 = ssub.s32 %s13, %s20
      %p48 = scmp.eq.s32.totalorder %s47, 0
      %s50 = sadd.s32 %s49, 1
      %s51 = scalar_select %p48, %s49, %s50
      %p54 = pneg %p48
      %p55 = scmp.eq.s32.totalorder %s13, 1
      %p56 = por %p54, %p55
      %p57 = scmp.ne.s32.totalorder %s49, %s52
      %p58 = scmp.eq.s32.totalorder %s13, 0
      %p59 = por %p57, %p58
      %p60 = scmp.ne.s32.totalorder %s49, %s52
      %p61 = scmp.eq.s32.totalorder %s18, 1
      %p62 = por %p60, %p61
      %p63 = scmp.ne.s32.totalorder %s52, %s53
      %p64 = scmp.eq.s32.totalorder %s18, 0
      %p65 = por %p63, %p64
      %p66 = scmp.ne.s32.totalorder %s52, %s53
      %p67 = scmp.eq.s32.totalorder %s19, 1
      %p68 = por %p66, %p67
      %p70 = scmp.ne.s32.totalorder %s53, %s69
      %p71 = scmp.eq.s32.totalorder %s19, 0
      %p72 = por %p70, %p71
      %p73 = scmp.le.s32.totalorder 1, %s13
      %p74 = scmp.lt.s32.totalorder %s13, 3
      %p75 = pnand %p73, %p74
      %p76 = pneg %p75
      // Predicated region
      $region9: #{tpu_custom_call.1} parent=5 // pred_check
        _
      $region10: #{tpu_custom_call.1} parent=5 // pred_check_branch
        %78 = sbr.rel (%p75) target = $region12
      $region11: #{tpu_custom_call.1} parent=5 // pred_region
        %s79 = ssub.s32 %s13, 1
      $region12: #{tpu_custom_call.1} parent=5 // pred_fallthru
        _
      %p80 = scmp.lt.s32.totalorder %s13, 2
      // Predicated region
      $region13: #{tpu_custom_call.1} parent=5 // pred_check
        %p81 = pneg %p80
      $region14: #{tpu_custom_call.1} parent=5 // pred_check_branch
        %83 = sbr.rel (%p81) target = $region16
      $region15: #{tpu_custom_call.1} parent=5 // pred_region
        // Predicated region
        $region17: #{tpu_custom_call.1} parent=15 // pred_check
          %p84 = pneg %p33
        $region18: #{tpu_custom_call.1} parent=15 // pred_check_branch
          %86 = sbr.rel (%p84) target = $region20
        $region19: #{tpu_custom_call.1} parent=15 // pred_region
          %s87 = sand.u32 %s23, 1
          %s88 = scalar_lea.sflag [#allocation3], %s87
          %s89 = sand.u32 %s23, 1
          %s90 = smul.addr %s89, 64
          %s91 = scalar_lea.vmem [#allocation2], %s90
          %s93 = ssub.s32 1024, 1024
          %94 = vsyncadd %s88, %s93
          %s95 = smul.addr %s13, 8
          %s96 = smul.addr %s95, 128
          %s97 = scalar_lea.hbm %s0, %s96
          %s98 = sshll.u32 %s91, 4
          %s99 = int_to_ptr.vmem [resolvable:$true] %s98
          %104 = dma.hbm_to_vmem [thread:$0]  %s97, 1024, %s99, %s88, 128, 128, 8
        $region20: #{tpu_custom_call.1} parent=15 // pred_fallthru
          _
      $region16: #{tpu_custom_call.1} parent=5 // pred_fallthru
        _
      %p105 = scmp.le.s32.totalorder 1, %s13
      %p106 = scmp.lt.s32.totalorder %s13, 3
      %p107 = pnand %p105, %p106
      %p108 = pneg %p107
      // Predicated region
      $region21: #{tpu_custom_call.1} parent=5 // pred_check
        _
      $region22: #{tpu_custom_call.1} parent=5 // pred_check_branch
        %110 = sbr.rel (%p107) target = $region24
      $region23: #{tpu_custom_call.1} parent=5 // pred_region
        %s111 = ssub.s32 %s13, 1
        %s112 = sand.u32 %s26, 1
        %s113 = scalar_lea.sflag [#allocation3], %s112
        %s114 = sand.u32 %s26, 1
        %s115 = smul.addr %s114, 64
        %s116 = scalar_lea.vmem [#allocation2], %s115
        // Predicated region
        $region25: #{tpu_custom_call.1} parent=23 // pred_check
          %p117 = pneg %p39
        $region26: #{tpu_custom_call.1} parent=23 // pred_check_branch
          %119 = sbr.rel (%p117) target = $region28
        $region27: #{tpu_custom_call.1} parent=23 // pred_region
          %120 = dma.done %s113, 1024
        $region28: #{tpu_custom_call.1} parent=23 // pred_fallthru
          _
        %s121 = sand.u32 %s26, 1
        %s122 = scalar_lea.sflag [#allocation3], %s121
        %s123 = sand.u32 %s26, 1
        %s124 = smul.addr %s123, 64
        %s125 = scalar_lea.vmem [#allocation2], %s124
        %p126 = pneg %p39
        %p127 = pneg %p36
        %p128 = pneg %p65
        %p129 = pneg %p62
        %s130 = sand.u32 %s52, 1
        %s131 = scalar_lea.sflag [#allocation4], %s130
        %s132 = sand.u32 %s52, 1
        %s133 = scalar_lea.vmem [#allocation5], %s132
        %v134 = vld [vmem:[%s116] sm:$0xff]
        %v135 = vld [vmem:[%s116 + $0x8] sm:$0xff]
        %v136 = vld [vmem:[%s116 + $0x10] sm:$0xff]
        %v137 = vld [vmem:[%s116 + $0x18] sm:$0xff]
        %v138 = vld [vmem:[%s116 + $0x20] sm:$0xff]
        %v139 = vld [vmem:[%s116 + $0x28] sm:$0xff]
        %v140 = vld [vmem:[%s116 + $0x30] sm:$0xff]
        %v141 = vld [vmem:[%s116 + $0x38] sm:$0xff]
        %vm142 = vcmask 130048
        %v143 = vsel %vm142, %v134, 0.0
        %v144 = vsel %vm142, %v136, 0.0
        %v145 = vadd.f32 %v143, %v144
        %v146 = vsel %vm142, %v138, 0.0
        %v147 = vadd.f32 %v145, %v146
        %v148 = vsel %vm142, %v140, 0.0
        %v149 = vadd.f32 %v147, %v148
        %v150 = vsel %vm142, %v135, 0.0
        %v151 = vsel %vm142, %v137, 0.0
        %v152 = vadd.f32 %v150, %v151
        %v153 = vsel %vm142, %v139, 0.0
        %v154 = vadd.f32 %v152, %v153
        %v155 = vsel %vm142, %v141, 0.0
        %v156 = vadd.f32 %v154, %v155
        %v157 = vsel %vm142, %v149, 0.0
        %158 = vadd.xlane.f32.xlu0 %v157
        %v159 = vpop.xlane.xlu0 %158
        %v160 = vsel %vm142, %v156, 0.0
        %161 = vadd.xlane.f32.xlu0 %v160
        %v162 = vpop.xlane.xlu0 %161
        %v163 = vmul.f32 %v159, 2.0
        %v164 = vmul.f32 %v162, 2.0
        %v167 = vlaneseq
        %v168 = vand.u32 %v167, 127
        %v169 = vlaneseq
        %v170 = vshrl.u32 %v169, 7
        %v171 = vsub.s32 %v168, %v170
        %v172 = vrot.slane %v163, %v171
        %v173 = vadd.s32 %v168, 4294967288
        %v174 = vlaneseq
        %v175 = vshrl.u32 %v174, 7
        %v176 = vsub.s32 %v173, %v175
        %v177 = vrot.slane %v164, %v176
        %vm178 = vcmask 130112
        %v179 = vsel %vm178, %v177, %v172
        %vm181 = vcmask 122880
        %182 = vst.msk [vmem:[%s133] sm:$0x1] %vm181, %v179
        %s183 = sand.u32 %s52, 1
        %s184 = scalar_lea.sflag [#allocation4], %s183
        %s185 = sand.u32 %s52, 1
        %s186 = scalar_lea.vmem [#allocation5], %s185
        // Predicated region
        $region29: #{tpu_custom_call.1} parent=23 // pred_check
          %p187 = pneg %p62
        $region30: #{tpu_custom_call.1} parent=23 // pred_check_branch
          %189 = sbr.rel (%p187) target = $region32
        $region31: #{tpu_custom_call.1} parent=23 // pred_region
          %s191 = ssub.s32 16, 16
          %192 = vsyncadd %s184, %s191
          %s193 = smul.addr %s18, 16
          %s194 = scalar_lea.hbm %s1, %s193
          %s196 = sshll.u32 %s186, 4
          %s197 = int_to_ptr.vmem [resolvable:$true] %s196
          %199 = dma.vmem_to_hbm [thread:$0]  %s197, 16, %s194, %s184
        $region32: #{tpu_custom_call.1} parent=23 // pred_fallthru
          _
      $region24: #{tpu_custom_call.1} parent=5 // pred_fallthru
        _
      %p200 = scmp.le.s32.totalorder 2, %s13
      // Predicated region
      $region33: #{tpu_custom_call.1} parent=5 // pred_check
        %p201 = pneg %p200
      $region34: #{tpu_custom_call.1} parent=5 // pred_check_branch
        %203 = sbr.rel (%p201) target = $region36
      $region35: #{tpu_custom_call.1} parent=5 // pred_region
        %s204 = ssub.s32 %s13, 2
        // Predicated region
        $region37: #{tpu_custom_call.1} parent=35 // pred_check
          %p205 = pneg %p68
        $region38: #{tpu_custom_call.1} parent=35 // pred_check_branch
          %207 = sbr.rel (%p205) target = $region40
        $region39: #{tpu_custom_call.1} parent=35 // pred_region
          %s208 = sand.u32 %s53, 1
          %s209 = scalar_lea.sflag [#allocation4], %s208
          %s210 = sand.u32 %s53, 1
          %s211 = scalar_lea.vmem [#allocation5], %s210
          %212 = dma.done %s209, 16
        $region40: #{tpu_custom_call.1} parent=35 // pred_fallthru
          _
      $region36: #{tpu_custom_call.1} parent=5 // pred_fallthru
        _
    $region6: #{tpu_custom_call.1} parent=1 // loop_footer
      %s17 = sadd.s32 1, %s13
    $region7: #{tpu_custom_call.1} parent=1 // loop_footer_branch
      %12 = sbr.rel target = $region3
    $region8: #{tpu_custom_call.1} parent=1 // loop_exit
      _
    %213 = vsyncpa [#allocation3], 1
    %s214 = scalar_lea.sflag [#allocation3], 1
    %215 = vsyncpa %s214, 1
    %216 = vsyncpa [#allocation4], 1
    %s217 = scalar_lea.sflag [#allocation4], 1
    %218 = vsyncpa %s217, 1

</llo_original>
